<compile_context>
chip_gen: v5e
topology: v5e:2x2
jax: 0.10.0
libtpu: 0.0.40
codegen_flags: <defaults>
</compile_context>

<pallas_src>
import jax
import jax.numpy as jnp
from jax.experimental import pallas as pl
from jax.experimental.pallas import tpu as pltpu

BN_EPS = 1e-5


# ----------------------------- Pallas kernel -----------------------------

def _make_backbone_kernel(num_p2p, fc_relu, folded, emit_map):
    """One grid step == one batch element.

    Fused: conv1d(k=1)+ReLU chain (layer i optionally per-batch pre-folded
    with an STN transform) -> max over points -> FC head.  Optionally emits
    the post-layer-0 activation map (bf16) as a second output.

    Ref layout per grid step:
      x_ref                    (Cin, N)      bf16
      [w_ref, b_ref] * layers  w bf16 (Co,Ci) shared or (1,Co,Ci) folded;
                               b f32 (Co,1)
      head_ref                 (1, Fout, 1)  f32  output
      [map_ref                 (C0,  N)      bf16 output]   if emit_map
    """
    num_fc = len(fc_relu)
    n_wb = 2 * (num_p2p + num_fc)

    def kernel(*refs):
        x_ref = refs[0]
        wb = refs[1:1 + n_wb]
        head_ref = refs[1 + n_wb]
        map_ref = refs[2 + n_wb] if emit_map else None

        # ---- Conv1d(k=1) + ReLU chain: channels on sublanes, points on lanes.
        h = x_ref[...]                                          # bf16 (Cin, N)
        for li in range(num_p2p):
            w_ref, b_ref = wb[2 * li], wb[2 * li + 1]
            w = w_ref[0] if folded[li] else w_ref[...]          # bf16 (Co, Ci)
            y = jnp.dot(w, h, preferred_element_type=jnp.float32) + b_ref[...]
            h = jnp.maximum(y, 0.0).astype(jnp.bfloat16)        # f32 epilogue, bf16 store
            if emit_map and li == 0:
                map_ref[...] = h                                # bf16 feature map

        # ---- per-batch max over points (lane reduction), stays in VMEM ----
        g = jnp.max(h.astype(jnp.float32), axis=1, keepdims=True)   # (C_last, 1)
        g = g.astype(jnp.bfloat16)

        # ---- FC head on the pooled feature vector ----
        y = None
        for li in range(num_fc):
            w_ref, b_ref = wb[2 * (num_p2p + li)], wb[2 * (num_p2p + li) + 1]
            y = jnp.dot(w_ref[...], g, preferred_element_type=jnp.float32) + b_ref[...]
            if fc_relu[li]:
                y = jnp.maximum(y, 0.0)
            g = y.astype(jnp.bfloat16)
        head_ref[0] = y                                         # (Fout, 1) f32

    return kernel


# ----------------------------- kernel wrapper -----------------------------

def fused_backbone(x_flat, p2p, fc, *, B, N, emit_map=False):
    """x_flat: (Cin, B*N).  p2p: [(w, b)] with w (Co, Ci) shared or (B, Co, Ci)
    per-batch pre-folded.  fc: [(w, b, relu)].
    Returns head (B, Fout) f32 and, if emit_map, the post-layer-0 activation
    map (C0, B*N) bf16."""
    cin = x_flat.shape[0]
    num_p2p, num_fc = len(p2p), len(fc)
    fc_relu = tuple(r for _, _, r in fc)
    folded = tuple(w.ndim == 3 for w, _ in p2p)
    f_out = fc[-1][0].shape[0]
    c0 = p2p[0][0].shape[-2]

    args = [x_flat.astype(jnp.bfloat16)]
    in_specs = [pl.BlockSpec((cin, N), lambda i: (0, i))]

    def add_wb(w, bias):
        if w.ndim == 3:                       # per-batch pre-folded weight
            in_specs.append(pl.BlockSpec((1,) + w.shape[1:], lambda i: (i, 0, 0)))
        else:                                 # shared weight, VMEM-resident
            in_specs.append(pl.BlockSpec(w.shape, lambda i: (0, 0)))
        args.append(w.astype(jnp.bfloat16))
        b2 = bias.reshape(-1, 1).astype(jnp.float32)
        in_specs.append(pl.BlockSpec(b2.shape, lambda i: (0, 0)))
        args.append(b2)

    for w, bias in p2p:
        add_wb(w, bias)
    for w, bias, _ in fc:
        add_wb(w, bias)

    out_shape = [jax.ShapeDtypeStruct((B, f_out, 1), jnp.float32)]
    out_specs = [pl.BlockSpec((1, f_out, 1), lambda i: (i, 0, 0))]
    if emit_map:
        out_shape.append(jax.ShapeDtypeStruct((c0, B * N), jnp.bfloat16))
        out_specs.append(pl.BlockSpec((c0, N), lambda i: (0, i)))

    outs = pl.pallas_call(
        _make_backbone_kernel(num_p2p, fc_relu, folded, emit_map),
        grid=(B,),
        in_specs=in_specs,
        out_specs=tuple(out_specs),
        out_shape=tuple(out_shape),
        compiler_params=pltpu.CompilerParams(
            dimension_semantics=("parallel",),   # batch shards over TCs on v7x
            vmem_limit_bytes=32 * 1024 * 1024),
    )(*args)

    head = outs[0].reshape(B, f_out)
    return (head, outs[1]) if emit_map else head


def _fold_transform(w, trans):
    """Fold an STN transform into the following conv weight, batched, in the
    JAX wrapper (f32): transformed input is trans_b^T @ x, so
    W_eff[b] = W @ trans_b^T, i.e. W_eff[b,o,c] = sum_i W[o,i] * trans[b,c,i]."""
    return jnp.einsum('oi,bci->boc', w, trans)


# ----------------------------- parameter init -----------------------------

def _fold_bn(w, b, gamma, beta, mean, var):
    scale = gamma / jnp.sqrt(var + BN_EPS)
    return w * scale[:, None], scale * (b - mean) + beta


def _init_affine(key, fan_in, fan_out, with_bn):
    ks = jax.random.split(key, 6)
    w = 0.1 * jax.random.normal(ks[0], (fan_out, fan_in), jnp.float32)
    b = 0.1 * jax.random.normal(ks[1], (fan_out,), jnp.float32)
    if not with_bn:
        return w, b
    gamma = 1.0 + 0.1 * jax.random.normal(ks[2], (fan_out,), jnp.float32)
    beta = 0.1 * jax.random.normal(ks[3], (fan_out,), jnp.float32)
    mean = 0.1 * jax.random.normal(ks[4], (fan_out,), jnp.float32)
    var = jnp.abs(1.0 + 0.1 * jax.random.normal(ks[5], (fan_out,), jnp.float32))
    return _fold_bn(w, b, gamma, beta, mean, var)


def init_stn(key, inpc, p2p_hiddens, fc_hiddens):
    n_p2p, n_fc = len(p2p_hiddens), len(fc_hiddens)
    keys = jax.random.split(key, n_p2p + n_fc + 1)
    p2p = []
    for k, (i, o) in zip(keys[:n_p2p], zip([inpc] + p2p_hiddens[:-1], p2p_hiddens)):
        p2p.append(_init_affine(k, i, o, with_bn=True))
    fc = []
    for k, (i, o) in zip(keys[n_p2p:n_p2p + n_fc],
                         zip(p2p_hiddens[-1:] + fc_hiddens[:-1], fc_hiddens)):
        w, b = _init_affine(k, i, o, with_bn=True)
        fc.append((w, b, True))
    w, b = _init_affine(keys[-1], fc_hiddens[-1], inpc * inpc, with_bn=False)
    fc.append((w, b, False))
    return {"inpc": inpc, "p2p": p2p, "fc": fc}


def init_pointnet(key, inpc, outc, p2p_hiddens, fc_hiddens,
                  stn3_kwargs, first_conv=64, stnk_kwargs=None):
    k_stn3, k_fc1, k_stnk, k_p2p, k_fc = jax.random.split(key, 5)
    params = {
        "stn3": init_stn(k_stn3, inpc, **stn3_kwargs),
        "first_conv": _init_affine(k_fc1, inpc, first_conv, with_bn=True),
        "stnk": init_stn(k_stnk, first_conv, **stnk_kwargs) if stnk_kwargs else None,
    }
    p2p = []
    kks = jax.random.split(k_p2p, len(p2p_hiddens))
    for k, (i, o) in zip(kks, zip([first_conv] + p2p_hiddens[:-1], p2p_hiddens)):
        p2p.append(_init_affine(k, i, o, with_bn=True))
    params["p2p_net"] = p2p
    fc = []
    kks = jax.random.split(k_fc, len(fc_hiddens) + 1)
    for k, (i, o) in zip(kks[:-1],
                         zip(p2p_hiddens[-1:] + fc_hiddens[:-1], fc_hiddens)):
        w, b = _init_affine(k, i, o, with_bn=True)
        fc.append((w, b, True))
    w, b = _init_affine(kks[-1], fc_hiddens[-1], outc, with_bn=False)
    fc.append((w, b, False))
    params["fc_net"] = fc
    return params


# ----------------------------- forward pass -----------------------------

def pointnet_forward(t, params):
    B, c_in, N = t.shape
    # Channel-major, lane-dense layout: (B, C, N) -> (C, B*N), bf16 storage.
    x_flat = jnp.transpose(t, (1, 0, 2)).reshape(c_in, B * N).astype(jnp.bfloat16)

    # --- STN3: fused conv chain + point-max + FC head -> (B, 3, 3) transform ---
    p3 = params["stn3"]
    inpc = p3["inpc"]
    head3 = fused_backbone(x_flat, p3["p2p"], p3["fc"], B=B, N=N)        # (B, 9)
    trans = head3.reshape(B, inpc, inpc) + jnp.eye(inpc, dtype=jnp.float32)[None]
    # TODO(synk): the reference's `trans_xyz and D > 3` split path uses an
    # undefined attribute (self.trans_dims) and is unreachable for inpc == D.

    w1, b1 = params["first_conv"]
    w1_eff = _fold_transform(w1, trans)                                  # (B, C1, 3)

    if params["stnk"] is not None:
        # first_conv (STN3 folded) fused with the STNk backbone; the bf16
        # first_conv activation map is emitted once for the trunk.
        pk = params["stnk"]
        k = pk["inpc"]
        p2p_k = [(w1_eff, b1)] + pk["p2p"]
        headk, x1_map = fused_backbone(x_flat, p2p_k, pk["fc"], B=B, N=N,
                                       emit_map=True)            # (B,k*k), (C1,B*N)
        trans_feat = headk.reshape(B, k, k) + jnp.eye(k, dtype=jnp.float32)[None]

        # trunk: p2p_net (STNk transform folded into layer 0) + max + fc_net.
        w_t0, b_t0 = params["p2p_net"][0]
        trunk_p2p = [(_fold_transform(w_t0, trans_feat), b_t0)] + params["p2p_net"][1:]
        logits = fused_backbone(x1_map, trunk_p2p, params["fc_net"], B=B, N=N)
        return [logits, trans, trans_feat]

    # No feature STN: fold first_conv straight into the trunk (the (C1, B*N)
    # map never touches HBM at all).
    trunk_p2p = [(w1_eff, b1)] + params["p2p_net"]
    logits = fused_backbone(x_flat, trunk_p2p, params["fc_net"], B=B, N=N)
    return [logits, trans]


# ----------------------------------- main -----------------------------------

if __name__ == "__main__":
    B, N = 2, 128           # batch, number of points (N multiple of 128 lanes)
    inpc, outc = 3, 10
    first_conv = 8
    p2p_hiddens = [16, 32]
    fc_hiddens = [32, 16]
    stn3_kwargs = dict(p2p_hiddens=[16, 32], fc_hiddens=[32, 16])
    stnk_kwargs = dict(p2p_hiddens=[16, 32], fc_hiddens=[32, 16])

    key = jax.random.PRNGKey(0)
    k_params, k_data = jax.random.split(key)
    params = init_pointnet(k_params, inpc, outc, p2p_hiddens, fc_hiddens,
                           stn3_kwargs, first_conv=first_conv,
                           stnk_kwargs=stnk_kwargs)

    t = jax.random.normal(k_data, (B, inpc, N), jnp.float32)

    outs = pointnet_forward(t, params)
    for o in outs:
        jax.block_until_ready(o)

    assert outs[0].shape == (B, outc)
    assert outs[1].shape == (B, inpc, inpc)
    assert outs[2].shape == (B, first_conv, first_conv)
    print("KERNEL_OK")
</pallas_src>

<mosaic_0001>
module attributes {stable_mosaic.version = 11 : i64} {
  func.func @kernel(%arg0: i32, %arg1: memref<3x128xbf16, #tpu.memory_space<vmem>>, %arg2: memref<16x3xbf16, #tpu.memory_space<vmem>>, %arg3: memref<16x1xf32, #tpu.memory_space<vmem>>, %arg4: memref<32x16xbf16, #tpu.memory_space<vmem>>, %arg5: memref<32x1xf32, #tpu.memory_space<vmem>>, %arg6: memref<32x32xbf16, #tpu.memory_space<vmem>>, %arg7: memref<32x1xf32, #tpu.memory_space<vmem>>, %arg8: memref<16x32xbf16, #tpu.memory_space<vmem>>, %arg9: memref<16x1xf32, #tpu.memory_space<vmem>>, %arg10: memref<9x16xbf16, #tpu.memory_space<vmem>>, %arg11: memref<9x1xf32, #tpu.memory_space<vmem>>, %arg12: memref<1x9x1xf32, #tpu.memory_space<vmem>>) attributes {dimension_semantics = [#tpu.dimension_semantics<parallel>], iteration_bounds = array<i64: 2>, scalar_prefetch = 0 : i64, scratch_operands = 0 : i64, tpu.core_type = #tpu.core_type<tc>, window_params = [{transform_indices = @transform_0, window_bounds = array<i64: 3, 128>}, {pipeline_mode = #tpu.pipeline_mode<synchronous>, transform_indices = @transform_1, window_bounds = array<i64: 16, 3>}, {pipeline_mode = #tpu.pipeline_mode<synchronous>, transform_indices = @transform_2, window_bounds = array<i64: 16, 1>}, {pipeline_mode = #tpu.pipeline_mode<synchronous>, transform_indices = @transform_3, window_bounds = array<i64: 32, 16>}, {pipeline_mode = #tpu.pipeline_mode<synchronous>, transform_indices = @transform_4, window_bounds = array<i64: 32, 1>}, {pipeline_mode = #tpu.pipeline_mode<synchronous>, transform_indices = @transform_5, window_bounds = array<i64: 32, 32>}, {pipeline_mode = #tpu.pipeline_mode<synchronous>, transform_indices = @transform_6, window_bounds = array<i64: 32, 1>}, {pipeline_mode = #tpu.pipeline_mode<synchronous>, transform_indices = @transform_7, window_bounds = array<i64: 16, 32>}, {pipeline_mode = #tpu.pipeline_mode<synchronous>, transform_indices = @transform_8, window_bounds = array<i64: 16, 1>}, {pipeline_mode = #tpu.pipeline_mode<synchronous>, transform_indices = @transform_9, window_bounds = array<i64: 9, 16>}, {pipeline_mode = #tpu.pipeline_mode<synchronous>, transform_indices = @transform_10, window_bounds = array<i64: 9, 1>}, {transform_indices = @transform_11, window_bounds = array<i64: 1, 9, 1>}]} {
    %c0 = arith.constant 0 : index
    %c0_0 = arith.constant 0 : index
    %0 = vector.load %arg1[%c0, %c0_0] : memref<3x128xbf16, #tpu.memory_space<vmem>>, vector<3x128xbf16>
    %c0_1 = arith.constant 0 : index
    %c0_2 = arith.constant 0 : index
    %1 = vector.load %arg2[%c0_1, %c0_2] : memref<16x3xbf16, #tpu.memory_space<vmem>>, vector<16x3xbf16>
    %cst = arith.constant dense<0.000000e+00> : vector<16x128xf32>
    %2 = tpu.matmul %1, %0, %cst {dimension_numbers = #tpu.dot_dimension_numbers<[1], [0], [0], [1], [0, 0, 1, 1], [], []>} : vector<16x3xbf16>, vector<3x128xbf16>, vector<16x128xf32> -> vector<16x128xf32>
    %c0_3 = arith.constant 0 : index
    %c0_4 = arith.constant 0 : index
    %3 = vector.load %arg3[%c0_3, %c0_4] : memref<16x1xf32, #tpu.memory_space<vmem>>, vector<16x1xf32>
    %4 = vector.broadcast %3 : vector<16x1xf32> to vector<16x128xf32>
    %5 = arith.addf %2, %4 : vector<16x128xf32>
    %cst_5 = arith.constant 0.000000e+00 : f32
    %6 = vector.broadcast %cst_5 : f32 to vector<16x128xf32>
    %7 = arith.maximumf %5, %6 : vector<16x128xf32>
    %8 = arith.truncf %7 : vector<16x128xf32> to vector<16x128xbf16>
    %c0_6 = arith.constant 0 : index
    %c0_7 = arith.constant 0 : index
    %9 = vector.load %arg4[%c0_6, %c0_7] : memref<32x16xbf16, #tpu.memory_space<vmem>>, vector<32x16xbf16>
    %cst_8 = arith.constant dense<0.000000e+00> : vector<32x128xf32>
    %10 = tpu.matmul %9, %8, %cst_8 {dimension_numbers = #tpu.dot_dimension_numbers<[1], [0], [0], [1], [0, 0, 1, 1], [], []>} : vector<32x16xbf16>, vector<16x128xbf16>, vector<32x128xf32> -> vector<32x128xf32>
    %c0_9 = arith.constant 0 : index
    %c0_10 = arith.constant 0 : index
    %11 = vector.load %arg5[%c0_9, %c0_10] : memref<32x1xf32, #tpu.memory_space<vmem>>, vector<32x1xf32>
    %12 = vector.broadcast %11 : vector<32x1xf32> to vector<32x128xf32>
    %13 = arith.addf %10, %12 : vector<32x128xf32>
    %cst_11 = arith.constant 0.000000e+00 : f32
    %14 = vector.broadcast %cst_11 : f32 to vector<32x128xf32>
    %15 = arith.maximumf %13, %14 : vector<32x128xf32>
    %16 = arith.truncf %15 : vector<32x128xf32> to vector<32x128xbf16>
    %17 = arith.extf %16 : vector<32x128xbf16> to vector<32x128xf32>
    %cst_12 = arith.constant dense<0xFF800000> : vector<32xf32>
    %18 = vector.multi_reduction <maximumf>, %17, %cst_12 [1] : vector<32x128xf32> to vector<32xf32>
    %19 = vector.shape_cast %18 : vector<32xf32> to vector<32x1xf32>
    %20 = arith.truncf %19 : vector<32x1xf32> to vector<32x1xbf16>
    %c0_13 = arith.constant 0 : index
    %c0_14 = arith.constant 0 : index
    %21 = vector.load %arg6[%c0_13, %c0_14] : memref<32x32xbf16, #tpu.memory_space<vmem>>, vector<32x32xbf16>
    %cst_15 = arith.constant dense<0.000000e+00> : vector<32x1xf32>
    %22 = tpu.matmul %21, %20, %cst_15 {dimension_numbers = #tpu.dot_dimension_numbers<[1], [0], [0], [1], [0, 0, 1, 1], [], []>} : vector<32x32xbf16>, vector<32x1xbf16>, vector<32x1xf32> -> vector<32x1xf32>
    %c0_16 = arith.constant 0 : index
    %c0_17 = arith.constant 0 : index
    %23 = vector.load %arg7[%c0_16, %c0_17] : memref<32x1xf32, #tpu.memory_space<vmem>>, vector<32x1xf32>
    %24 = arith.addf %22, %23 : vector<32x1xf32>
    %cst_18 = arith.constant 0.000000e+00 : f32
    %25 = vector.broadcast %cst_18 : f32 to vector<32x1xf32>
    %26 = arith.maximumf %24, %25 : vector<32x1xf32>
    %27 = arith.truncf %26 : vector<32x1xf32> to vector<32x1xbf16>
    %c0_19 = arith.constant 0 : index
    %c0_20 = arith.constant 0 : index
    %28 = vector.load %arg8[%c0_19, %c0_20] : memref<16x32xbf16, #tpu.memory_space<vmem>>, vector<16x32xbf16>
    %cst_21 = arith.constant dense<0.000000e+00> : vector<16x1xf32>
    %29 = tpu.matmul %28, %27, %cst_21 {dimension_numbers = #tpu.dot_dimension_numbers<[1], [0], [0], [1], [0, 0, 1, 1], [], []>} : vector<16x32xbf16>, vector<32x1xbf16>, vector<16x1xf32> -> vector<16x1xf32>
    %c0_22 = arith.constant 0 : index
    %c0_23 = arith.constant 0 : index
    %30 = vector.load %arg9[%c0_22, %c0_23] : memref<16x1xf32, #tpu.memory_space<vmem>>, vector<16x1xf32>
    %31 = arith.addf %29, %30 : vector<16x1xf32>
    %cst_24 = arith.constant 0.000000e+00 : f32
    %32 = vector.broadcast %cst_24 : f32 to vector<16x1xf32>
    %33 = arith.maximumf %31, %32 : vector<16x1xf32>
    %34 = arith.truncf %33 : vector<16x1xf32> to vector<16x1xbf16>
    %c0_25 = arith.constant 0 : index
    %c0_26 = arith.constant 0 : index
    %35 = vector.load %arg10[%c0_25, %c0_26] : memref<9x16xbf16, #tpu.memory_space<vmem>>, vector<9x16xbf16>
    %cst_27 = arith.constant dense<0.000000e+00> : vector<9x1xf32>
    %36 = tpu.matmul %35, %34, %cst_27 {dimension_numbers = #tpu.dot_dimension_numbers<[1], [0], [0], [1], [0, 0, 1, 1], [], []>} : vector<9x16xbf16>, vector<16x1xbf16>, vector<9x1xf32> -> vector<9x1xf32>
    %c0_28 = arith.constant 0 : index
    %c0_29 = arith.constant 0 : index
    %37 = vector.load %arg11[%c0_28, %c0_29] : memref<9x1xf32, #tpu.memory_space<vmem>>, vector<9x1xf32>
    %38 = arith.addf %36, %37 : vector<9x1xf32>
    %c0_30 = arith.constant 0 : index
    %c0_31 = arith.constant 0 : index
    %c0_32 = arith.constant 0 : index
    %39 = vector.load %arg12[%c0_30, %c0_31, %c0_32] : memref<1x9x1xf32, #tpu.memory_space<vmem>>, vector<1x9x1xf32>
    %40 = vector.shape_cast %39 : vector<1x9x1xf32> to vector<9x1xf32>
    %41 = vector.shape_cast %38 : vector<9x1xf32> to vector<1x9x1xf32>
    tpu.vector_store %arg12[%c0_30, %c0_31, %c0_32], %41 {strides = array<i32>} : memref<1x9x1xf32, #tpu.memory_space<vmem>>, vector<1x9x1xf32>,
    return
  }
  func.func @transform_0(%arg0: i32) -> (i32, i32) {
    %c0_i32 = arith.constant 0 : i32
    %c0_i32_0 = arith.constant 0 : i32
    return %c0_i32, %arg0 : i32, i32
  }
  func.func @transform_1(%arg0: i32) -> (i32, i32) {
    %c0_i32 = arith.constant 0 : i32
    %c0_i32_0 = arith.constant 0 : i32
    %c0_i32_1 = arith.constant 0 : i32
    return %c0_i32, %c0_i32_0 : i32, i32
  }
  func.func @transform_2(%arg0: i32) -> (i32, i32) {
    %c0_i32 = arith.constant 0 : i32
    %c0_i32_0 = arith.constant 0 : i32
    %c0_i32_1 = arith.constant 0 : i32
    return %c0_i32, %c0_i32_0 : i32, i32
  }
  func.func @transform_3(%arg0: i32) -> (i32, i32) {
    %c0_i32 = arith.constant 0 : i32
    %c0_i32_0 = arith.constant 0 : i32
    %c0_i32_1 = arith.constant 0 : i32
    return %c0_i32, %c0_i32_0 : i32, i32
  }
  func.func @transform_4(%arg0: i32) -> (i32, i32) {
    %c0_i32 = arith.constant 0 : i32
    %c0_i32_0 = arith.constant 0 : i32
    %c0_i32_1 = arith.constant 0 : i32
    return %c0_i32, %c0_i32_0 : i32, i32
  }
  func.func @transform_5(%arg0: i32) -> (i32, i32) {
    %c0_i32 = arith.constant 0 : i32
    %c0_i32_0 = arith.constant 0 : i32
    %c0_i32_1 = arith.constant 0 : i32
    return %c0_i32, %c0_i32_0 : i32, i32
  }
  func.func @transform_6(%arg0: i32) -> (i32, i32) {
    %c0_i32 = arith.constant 0 : i32
    %c0_i32_0 = arith.constant 0 : i32
    %c0_i32_1 = arith.constant 0 : i32
    return %c0_i32, %c0_i32_0 : i32, i32
  }
  func.func @transform_7(%arg0: i32) -> (i32, i32) {
    %c0_i32 = arith.constant 0 : i32
    %c0_i32_0 = arith.constant 0 : i32
    %c0_i32_1 = arith.constant 0 : i32
    return %c0_i32, %c0_i32_0 : i32, i32
  }
  func.func @transform_8(%arg0: i32) -> (i32, i32) {
    %c0_i32 = arith.constant 0 : i32
    %c0_i32_0 = arith.constant 0 : i32
    %c0_i32_1 = arith.constant 0 : i32
    return %c0_i32, %c0_i32_0 : i32, i32
  }
  func.func @transform_9(%arg0: i32) -> (i32, i32) {
    %c0_i32 = arith.constant 0 : i32
    %c0_i32_0 = arith.constant 0 : i32
    %c0_i32_1 = arith.constant 0 : i32
    return %c0_i32, %c0_i32_0 : i32, i32
  }
  func.func @transform_10(%arg0: i32) -> (i32, i32) {
    %c0_i32 = arith.constant 0 : i32
    %c0_i32_0 = arith.constant 0 : i32
    %c0_i32_1 = arith.constant 0 : i32
    return %c0_i32, %c0_i32_0 : i32, i32
  }
  func.func @transform_11(%arg0: i32) -> (i32, i32, i32) {
    %c0_i32 = arith.constant 0 : i32
    %c0_i32_0 = arith.constant 0 : i32
    %c0_i32_1 = arith.constant 0 : i32
    return %arg0, %c0_i32, %c0_i32_0 : i32, i32, i32
  }
}

</mosaic_0001>

<llo_original>
// kernel: tpu_custom_call.1
$region0: #{tpu_custom_call.1}
  #allocation0 [shape = 'u32[]', space=smem, size = 0x4, offset = 0x4, fixed_abs, tag = 'smem constant byte address 0x4 - core index']
  #allocation1 [shape = 'u32[72,128]{1,0:T(1,128)}', space=vmem, size = 0x9000, scoped, tag = 'internal scratch']
  %s0 = inlined_call_operand.vmem [shape: bf16[3,256], index: 0, kind: input, shape index: {}]
  %s1 = inlined_call_operand.vmem [shape: bf16[16,3], index: 1, kind: input, shape index: {}]
  %s2 = inlined_call_operand.vmem [shape: f32[16,1], index: 2, kind: input, shape index: {}]
  %s3 = inlined_call_operand.vmem [shape: bf16[32,16], index: 3, kind: input, shape index: {}]
  %s4 = inlined_call_operand.vmem [shape: f32[32,1], index: 4, kind: input, shape index: {}]
  %s5 = inlined_call_operand.vmem [shape: bf16[32,32], index: 5, kind: input, shape index: {}]
  %s6 = inlined_call_operand.vmem [shape: f32[32,1], index: 6, kind: input, shape index: {}]
  %s7 = inlined_call_operand.vmem [shape: bf16[16,32], index: 7, kind: input, shape index: {}]
  %s8 = inlined_call_operand.vmem [shape: f32[16,1], index: 8, kind: input, shape index: {}]
  %s9 = inlined_call_operand.vmem [shape: bf16[9,16], index: 9, kind: input, shape index: {}]
  %s10 = inlined_call_operand.vmem [shape: f32[9,1], index: 10, kind: input, shape index: {}]
  %s11 = inlined_call_operand.vmem [shape: f32[2,9,1], index: 11, kind: output, shape index: {}]
  %s12 = sld [smem:[#allocation0]]
  $region77: #{tpu_custom_call.1} parent=0
    _
  %s14 = ssub.s32 1, %s12
  %s15 = scalar_select 0, %s14, %s12
  loop: start=0, step=1, limit=4
  $region2: #{tpu_custom_call.1} parent=0 // loop_pre_header
    _
  $region3: #{tpu_custom_call.1} parent=0 // loop_header
    %s17 = sphi 0, %s21
    %p18 = scmp.ge.s32.totalorder %s17, 4
    %s27 = sphi 0, %s29
    %s30 = sphi 0, %s27
    %s31 = sphi 0, %s30
    %s47 = sphi 0, %s31
    %s51 = sphi 0, %s51
    %s53 = sphi 0, %s51
    %s54 = sphi 0, %s53
    %s68 = sphi 0, %s54
    %s72 = sphi 0, %s72
    %s74 = sphi 0, %s72
    %s75 = sphi 0, %s74
    %s89 = sphi 0, %s75
    %s93 = sphi 0, %s93
    %s95 = sphi 0, %s93
    %s96 = sphi 0, %s95
    %s110 = sphi 0, %s96
    %s114 = sphi 0, %s114
    %s116 = sphi 0, %s114
    %s117 = sphi 0, %s116
    %s131 = sphi 0, %s117
    %s135 = sphi 0, %s135
    %s137 = sphi 0, %s135
    %s138 = sphi 0, %s137
    %s152 = sphi 0, %s138
    %s156 = sphi 0, %s156
    %s158 = sphi 0, %s156
    %s159 = sphi 0, %s158
    %s173 = sphi 0, %s159
    %s177 = sphi 0, %s177
    %s179 = sphi 0, %s177
    %s180 = sphi 0, %s179
    %s194 = sphi 0, %s180
    %s198 = sphi 0, %s198
    %s200 = sphi 0, %s198
    %s201 = sphi 0, %s200
    %s215 = sphi 0, %s201
    %s219 = sphi 0, %s219
    %s221 = sphi 0, %s219
    %s222 = sphi 0, %s221
    %s236 = sphi 0, %s222
    %s240 = sphi 0, %s240
    %s242 = sphi 0, %s240
    %s243 = sphi 0, %s242
    %s257 = sphi 0, %s243
    %s263 = sphi 0, %s265
    %s266 = sphi 0, %s263
    %s267 = sphi 0, %s266
    %s283 = sphi 0, %s267
  $region4: #{tpu_custom_call.1} parent=0 // loop_header_branch
    %20 = sbr.rel (%p18) target = $region8
  $region5: #{tpu_custom_call.1} parent=0 // loop_body
    %s22 = ssub.s32 %s17, 1
    %s23 = ssub.s32 %s17, 2
    %s24 = sadd.s32 %s17, 1
    %s25 = ssub.s32 %s17, %s24
    %p26 = scmp.eq.s32.totalorder %s25, 0
    %s28 = sadd.s32 %s27, 1
    %s29 = scalar_select %p26, %s27, %s28
    %p32 = pneg %p26
    %p33 = scmp.eq.s32.totalorder %s17, 1
    %p34 = por %p32, %p33
    %p35 = scmp.ne.s32.totalorder %s27, %s30
    %p36 = scmp.eq.s32.totalorder %s17, 0
    %p37 = por %p35, %p36
    %p38 = scmp.ne.s32.totalorder %s27, %s30
    %p39 = scmp.eq.s32.totalorder %s22, 1
    %p40 = por %p38, %p39
    %p41 = scmp.ne.s32.totalorder %s30, %s31
    %p42 = scmp.eq.s32.totalorder %s22, 0
    %p43 = por %p41, %p42
    %p44 = scmp.ne.s32.totalorder %s30, %s31
    %p45 = scmp.eq.s32.totalorder %s23, 1
    %p46 = por %p44, %p45
    %p48 = scmp.ne.s32.totalorder %s31, %s47
    %p49 = scmp.eq.s32.totalorder %s23, 0
    %p50 = por %p48, %p49
    %s52 = sadd.s32 %s51, 1
    %p55 = scmp.eq.s32.totalorder %s17, 1
    %p56 = scmp.ne.s32.totalorder %s51, %s53
    %p57 = scmp.eq.s32.totalorder %s17, 0
    %p58 = por %p56, %p57
    %p59 = scmp.ne.s32.totalorder %s51, %s53
    %p60 = scmp.eq.s32.totalorder %s22, 1
    %p61 = por %p59, %p60
    %p62 = scmp.ne.s32.totalorder %s53, %s54
    %p63 = scmp.eq.s32.totalorder %s22, 0
    %p64 = por %p62, %p63
    %p65 = scmp.ne.s32.totalorder %s53, %s54
    %p66 = scmp.eq.s32.totalorder %s23, 1
    %p67 = por %p65, %p66
    %p69 = scmp.ne.s32.totalorder %s54, %s68
    %p70 = scmp.eq.s32.totalorder %s23, 0
    %p71 = por %p69, %p70
    %s73 = sadd.s32 %s72, 1
    %p76 = scmp.eq.s32.totalorder %s17, 1
    %p77 = scmp.ne.s32.totalorder %s72, %s74
    %p78 = scmp.eq.s32.totalorder %s17, 0
    %p79 = por %p77, %p78
    %p80 = scmp.ne.s32.totalorder %s72, %s74
    %p81 = scmp.eq.s32.totalorder %s22, 1
    %p82 = por %p80, %p81
    %p83 = scmp.ne.s32.totalorder %s74, %s75
    %p84 = scmp.eq.s32.totalorder %s22, 0
    %p85 = por %p83, %p84
    %p86 = scmp.ne.s32.totalorder %s74, %s75
    %p87 = scmp.eq.s32.totalorder %s23, 1
    %p88 = por %p86, %p87
    %p90 = scmp.ne.s32.totalorder %s75, %s89
    %p91 = scmp.eq.s32.totalorder %s23, 0
    %p92 = por %p90, %p91
    %s94 = sadd.s32 %s93, 1
    %p97 = scmp.eq.s32.totalorder %s17, 1
    %p98 = scmp.ne.s32.totalorder %s93, %s95
    %p99 = scmp.eq.s32.totalorder %s17, 0
    %p100 = por %p98, %p99
    %p101 = scmp.ne.s32.totalorder %s93, %s95
    %p102 = scmp.eq.s32.totalorder %s22, 1
    %p103 = por %p101, %p102
    %p104 = scmp.ne.s32.totalorder %s95, %s96
    %p105 = scmp.eq.s32.totalorder %s22, 0
    %p106 = por %p104, %p105
    %p107 = scmp.ne.s32.totalorder %s95, %s96
    %p108 = scmp.eq.s32.totalorder %s23, 1
    %p109 = por %p107, %p108
    %p111 = scmp.ne.s32.totalorder %s96, %s110
    %p112 = scmp.eq.s32.totalorder %s23, 0
    %p113 = por %p111, %p112
    %s115 = sadd.s32 %s114, 1
    %p118 = scmp.eq.s32.totalorder %s17, 1
    %p119 = scmp.ne.s32.totalorder %s114, %s116
    %p120 = scmp.eq.s32.totalorder %s17, 0
    %p121 = por %p119, %p120
    %p122 = scmp.ne.s32.totalorder %s114, %s116
    %p123 = scmp.eq.s32.totalorder %s22, 1
    %p124 = por %p122, %p123
    %p125 = scmp.ne.s32.totalorder %s116, %s117
    %p126 = scmp.eq.s32.totalorder %s22, 0
    %p127 = por %p125, %p126
    %p128 = scmp.ne.s32.totalorder %s116, %s117
    %p129 = scmp.eq.s32.totalorder %s23, 1
    %p130 = por %p128, %p129
    %p132 = scmp.ne.s32.totalorder %s117, %s131
    %p133 = scmp.eq.s32.totalorder %s23, 0
    %p134 = por %p132, %p133
    %s136 = sadd.s32 %s135, 1
    %p139 = scmp.eq.s32.totalorder %s17, 1
    %p140 = scmp.ne.s32.totalorder %s135, %s137
    %p141 = scmp.eq.s32.totalorder %s17, 0
    %p142 = por %p140, %p141
    %p143 = scmp.ne.s32.totalorder %s135, %s137
    %p144 = scmp.eq.s32.totalorder %s22, 1
    %p145 = por %p143, %p144
    %p146 = scmp.ne.s32.totalorder %s137, %s138
    %p147 = scmp.eq.s32.totalorder %s22, 0
    %p148 = por %p146, %p147
    %p149 = scmp.ne.s32.totalorder %s137, %s138
    %p150 = scmp.eq.s32.totalorder %s23, 1
    %p151 = por %p149, %p150
    %p153 = scmp.ne.s32.totalorder %s138, %s152
    %p154 = scmp.eq.s32.totalorder %s23, 0
    %p155 = por %p153, %p154
    %s157 = sadd.s32 %s156, 1
    %p160 = scmp.eq.s32.totalorder %s17, 1
    %p161 = scmp.ne.s32.totalorder %s156, %s158
    %p162 = scmp.eq.s32.totalorder %s17, 0
    %p163 = por %p161, %p162
    %p164 = scmp.ne.s32.totalorder %s156, %s158
    %p165 = scmp.eq.s32.totalorder %s22, 1
    %p166 = por %p164, %p165
    %p167 = scmp.ne.s32.totalorder %s158, %s159
    %p168 = scmp.eq.s32.totalorder %s22, 0
    %p169 = por %p167, %p168
    %p170 = scmp.ne.s32.totalorder %s158, %s159
    %p171 = scmp.eq.s32.totalorder %s23, 1
    %p172 = por %p170, %p171
    %p174 = scmp.ne.s32.totalorder %s159, %s173
    %p175 = scmp.eq.s32.totalorder %s23, 0
    %p176 = por %p174, %p175
    %s178 = sadd.s32 %s177, 1
    %p181 = scmp.eq.s32.totalorder %s17, 1
    %p182 = scmp.ne.s32.totalorder %s177, %s179
    %p183 = scmp.eq.s32.totalorder %s17, 0
    %p184 = por %p182, %p183
    %p185 = scmp.ne.s32.totalorder %s177, %s179
    %p186 = scmp.eq.s32.totalorder %s22, 1
    %p187 = por %p185, %p186
    %p188 = scmp.ne.s32.totalorder %s179, %s180
    %p189 = scmp.eq.s32.totalorder %s22, 0
    %p190 = por %p188, %p189
    %p191 = scmp.ne.s32.totalorder %s179, %s180
    %p192 = scmp.eq.s32.totalorder %s23, 1
    %p193 = por %p191, %p192
    %p195 = scmp.ne.s32.totalorder %s180, %s194
    %p196 = scmp.eq.s32.totalorder %s23, 0
    %p197 = por %p195, %p196
    %s199 = sadd.s32 %s198, 1
    %p202 = scmp.eq.s32.totalorder %s17, 1
    %p203 = scmp.ne.s32.totalorder %s198, %s200
    %p204 = scmp.eq.s32.totalorder %s17, 0
    %p205 = por %p203, %p204
    %p206 = scmp.ne.s32.totalorder %s198, %s200
    %p207 = scmp.eq.s32.totalorder %s22, 1
    %p208 = por %p206, %p207
    %p209 = scmp.ne.s32.totalorder %s200, %s201
    %p210 = scmp.eq.s32.totalorder %s22, 0
    %p211 = por %p209, %p210
    %p212 = scmp.ne.s32.totalorder %s200, %s201
    %p213 = scmp.eq.s32.totalorder %s23, 1
    %p214 = por %p212, %p213
    %p216 = scmp.ne.s32.totalorder %s201, %s215
    %p217 = scmp.eq.s32.totalorder %s23, 0
    %p218 = por %p216, %p217
    %s220 = sadd.s32 %s219, 1
    %p223 = scmp.eq.s32.totalorder %s17, 1
    %p224 = scmp.ne.s32.totalorder %s219, %s221
    %p225 = scmp.eq.s32.totalorder %s17, 0
    %p226 = por %p224, %p225
    %p227 = scmp.ne.s32.totalorder %s219, %s221
    %p228 = scmp.eq.s32.totalorder %s22, 1
    %p229 = por %p227, %p228
    %p230 = scmp.ne.s32.totalorder %s221, %s222
    %p231 = scmp.eq.s32.totalorder %s22, 0
    %p232 = por %p230, %p231
    %p233 = scmp.ne.s32.totalorder %s221, %s222
    %p234 = scmp.eq.s32.totalorder %s23, 1
    %p235 = por %p233, %p234
    %p237 = scmp.ne.s32.totalorder %s222, %s236
    %p238 = scmp.eq.s32.totalorder %s23, 0
    %p239 = por %p237, %p238
    %s241 = sadd.s32 %s240, 1
    %p244 = scmp.eq.s32.totalorder %s17, 1
    %p245 = scmp.ne.s32.totalorder %s240, %s242
    %p246 = scmp.eq.s32.totalorder %s17, 0
    %p247 = por %p245, %p246
    %p248 = scmp.ne.s32.totalorder %s240, %s242
    %p249 = scmp.eq.s32.totalorder %s22, 1
    %p250 = por %p248, %p249
    %p251 = scmp.ne.s32.totalorder %s242, %s243
    %p252 = scmp.eq.s32.totalorder %s22, 0
    %p253 = por %p251, %p252
    %p254 = scmp.ne.s32.totalorder %s242, %s243
    %p255 = scmp.eq.s32.totalorder %s23, 1
    %p256 = por %p254, %p255
    %p258 = scmp.ne.s32.totalorder %s243, %s257
    %p259 = scmp.eq.s32.totalorder %s23, 0
    %p260 = por %p258, %p259
    %s261 = ssub.s32 %s17, %s24
    %p262 = scmp.eq.s32.totalorder %s261, 0
    %s264 = sadd.s32 %s263, 1
    %s265 = scalar_select %p262, %s263, %s264
    %p268 = pneg %p262
    %p269 = scmp.eq.s32.totalorder %s17, 1
    %p270 = por %p268, %p269
    %p271 = scmp.ne.s32.totalorder %s263, %s266
    %p272 = scmp.eq.s32.totalorder %s17, 0
    %p273 = por %p271, %p272
    %p274 = scmp.ne.s32.totalorder %s263, %s266
    %p275 = scmp.eq.s32.totalorder %s22, 1
    %p276 = por %p274, %p275
    %p277 = scmp.ne.s32.totalorder %s266, %s267
    %p278 = scmp.eq.s32.totalorder %s22, 0
    %p279 = por %p277, %p278
    %p280 = scmp.ne.s32.totalorder %s266, %s267
    %p281 = scmp.eq.s32.totalorder %s23, 1
    %p282 = por %p280, %p281
    %p284 = scmp.ne.s32.totalorder %s267, %s283
    %p285 = scmp.eq.s32.totalorder %s23, 0
    %p286 = por %p284, %p285
    %p287 = scmp.le.s32.totalorder 1, %s17
    %p288 = scmp.lt.s32.totalorder %s17, 3
    %p289 = pnand %p287, %p288
    %p290 = pneg %p289
    // Predicated region
    $region9: #{tpu_custom_call.1} parent=5 // pred_check
      _
    $region10: #{tpu_custom_call.1} parent=5 // pred_check_branch
      %292 = sbr.rel (%p289) target = $region12
    $region11: #{tpu_custom_call.1} parent=5 // pred_region
      %s293 = ssub.s32 %s17, 1
      // Predicated region
      $region13: #{tpu_custom_call.1} parent=11 // pred_check
        %p294 = pneg %p64
      $region14: #{tpu_custom_call.1} parent=11 // pred_check_branch
        %296 = sbr.rel (%p294) target = $region16
      $region15: #{tpu_custom_call.1} parent=11 // pred_region
        _
      $region16: #{tpu_custom_call.1} parent=11 // pred_fallthru
        _
      // Predicated region
      $region17: #{tpu_custom_call.1} parent=11 // pred_check
        %p297 = pneg %p85
      $region18: #{tpu_custom_call.1} parent=11 // pred_check_branch
        %299 = sbr.rel (%p297) target = $region20
      $region19: #{tpu_custom_call.1} parent=11 // pred_region
        _
      $region20: #{tpu_custom_call.1} parent=11 // pred_fallthru
        _
      // Predicated region
      $region21: #{tpu_custom_call.1} parent=11 // pred_check
        %p300 = pneg %p106
      $region22: #{tpu_custom_call.1} parent=11 // pred_check_branch
        %302 = sbr.rel (%p300) target = $region24
      $region23: #{tpu_custom_call.1} parent=11 // pred_region
        _
      $region24: #{tpu_custom_call.1} parent=11 // pred_fallthru
        _
      // Predicated region
      $region25: #{tpu_custom_call.1} parent=11 // pred_check
        %p303 = pneg %p127
      $region26: #{tpu_custom_call.1} parent=11 // pred_check_branch
        %305 = sbr.rel (%p303) target = $region28
      $region27: #{tpu_custom_call.1} parent=11 // pred_region
        _
      $region28: #{tpu_custom_call.1} parent=11 // pred_fallthru
        _
      // Predicated region
      $region29: #{tpu_custom_call.1} parent=11 // pred_check
        %p306 = pneg %p148
      $region30: #{tpu_custom_call.1} parent=11 // pred_check_branch
        %308 = sbr.rel (%p306) target = $region32
      $region31: #{tpu_custom_call.1} parent=11 // pred_region
        _
      $region32: #{tpu_custom_call.1} parent=11 // pred_fallthru
        _
      // Predicated region
      $region33: #{tpu_custom_call.1} parent=11 // pred_check
        %p309 = pneg %p169
      $region34: #{tpu_custom_call.1} parent=11 // pred_check_branch
        %311 = sbr.rel (%p309) target = $region36
      $region35: #{tpu_custom_call.1} parent=11 // pred_region
        _
      $region36: #{tpu_custom_call.1} parent=11 // pred_fallthru
        _
      // Predicated region
      $region37: #{tpu_custom_call.1} parent=11 // pred_check
        %p312 = pneg %p190
      $region38: #{tpu_custom_call.1} parent=11 // pred_check_branch
        %314 = sbr.rel (%p312) target = $region40
      $region39: #{tpu_custom_call.1} parent=11 // pred_region
        _
      $region40: #{tpu_custom_call.1} parent=11 // pred_fallthru
        _
      // Predicated region
      $region41: #{tpu_custom_call.1} parent=11 // pred_check
        %p315 = pneg %p211
      $region42: #{tpu_custom_call.1} parent=11 // pred_check_branch
        %317 = sbr.rel (%p315) target = $region44
      $region43: #{tpu_custom_call.1} parent=11 // pred_region
        _
      $region44: #{tpu_custom_call.1} parent=11 // pred_fallthru
        _
      // Predicated region
      $region45: #{tpu_custom_call.1} parent=11 // pred_check
        %p318 = pneg %p232
      $region46: #{tpu_custom_call.1} parent=11 // pred_check_branch
        %320 = sbr.rel (%p318) target = $region48
      $region47: #{tpu_custom_call.1} parent=11 // pred_region
        _
      $region48: #{tpu_custom_call.1} parent=11 // pred_fallthru
        _
      // Predicated region
      $region49: #{tpu_custom_call.1} parent=11 // pred_check
        %p321 = pneg %p253
      $region50: #{tpu_custom_call.1} parent=11 // pred_check_branch
        %323 = sbr.rel (%p321) target = $region52
      $region51: #{tpu_custom_call.1} parent=11 // pred_region
        _
      $region52: #{tpu_custom_call.1} parent=11 // pred_fallthru
        _
    $region12: #{tpu_custom_call.1} parent=5 // pred_fallthru
      _
    %p324 = scmp.lt.s32.totalorder %s17, 2
    // Predicated region
    $region53: #{tpu_custom_call.1} parent=5 // pred_check
      %p325 = pneg %p324
    $region54: #{tpu_custom_call.1} parent=5 // pred_check_branch
      %327 = sbr.rel (%p325) target = $region56
    $region55: #{tpu_custom_call.1} parent=5 // pred_region
      // Predicated region
      $region57: #{tpu_custom_call.1} parent=55 // pred_check
        %p328 = pneg %p37
      $region58: #{tpu_custom_call.1} parent=55 // pred_check_branch
        %330 = sbr.rel (%p328) target = $region60
      $region59: #{tpu_custom_call.1} parent=55 // pred_region
        %p331 = scmp.lt.s32.totalorder %s17, 1
        %s332 = scalar_select %p331, %s17, 1
        %s333 = smul.addr %s332, 2
        %s334 = scalar_lea.vmem %s0, %s333
      $region60: #{tpu_custom_call.1} parent=55 // pred_fallthru
        _
    $region56: #{tpu_custom_call.1} parent=5 // pred_fallthru
      _
    %p335 = scmp.le.s32.totalorder 1, %s17
    %p336 = scmp.lt.s32.totalorder %s17, 3
    %p337 = pnand %p335, %p336
    %p338 = pneg %p337
    // Predicated region
    $region61: #{tpu_custom_call.1} parent=5 // pred_check
      _
    $region62: #{tpu_custom_call.1} parent=5 // pred_check_branch
      %340 = sbr.rel (%p337) target = $region64
    $region63: #{tpu_custom_call.1} parent=5 // pred_region
      %s341 = ssub.s32 %s17, 1
      %p342 = scmp.lt.s32.totalorder %s22, 1
      %s343 = scalar_select %p342, %s22, 1
      %s344 = smul.addr %s343, 2
      %s345 = scalar_lea.vmem %s0, %s344
      %p346 = pneg %p43
      %p347 = pneg %p40
      %p348 = pneg %p64
      %p349 = pneg %p61
      %p350 = pneg %p85
      %p351 = pneg %p82
      %p352 = pneg %p106
      %p353 = pneg %p103
      %p354 = pneg %p127
      %p355 = pneg %p124
      %p356 = pneg %p148
      %p357 = pneg %p145
      %p358 = pneg %p169
      %p359 = pneg %p166
      %p360 = pneg %p190
      %p361 = pneg %p187
      %p362 = pneg %p211
      %p363 = pneg %p208
      %p364 = pneg %p232
      %p365 = pneg %p229
      %p366 = pneg %p253
      %p367 = pneg %p250
      %p368 = pneg %p279
      %p369 = pneg %p276
      %p370 = scmp.lt.s32.totalorder %s22, 1
      %s371 = scalar_select %p370, %s22, 1
      %s372 = smul.addr %s371, 2
      %s373 = smul.addr %s372, 8
      %s374 = scalar_lea.vmem %s11, %s373
      %p375 = scmp.lt.s32.totalorder %s22, 1
      %s376 = scalar_select %p375, %s22, 1
      %s377 = smul.addr %s376, 2
      %s378 = scalar_lea.vmem %s0, %s377
      %p379 = scmp.lt.s32.totalorder %s22, 1
      %s380 = scalar_select %p379, %s22, 1
      %s381 = smul.addr %s380, 2
      %s382 = smul.addr %s381, 8
      %s383 = scalar_lea.vmem %s11, %s382
      %v385 = vld [vmem:[%s378] sm:$0x3]
      %v386 = vld [vmem:[%s1] sm:$0xf]
      %v387 = vld [vmem:[%s1 + $0x4] sm:$0xf]
      %v388 = vld [vmem:[%s2] sm:$0xff]
      %v389 = vld [vmem:[%s2 + $0x8] sm:$0xff]
      %391 = vset.pattern.permute.xlu0 0
      %392 = vperm.xlu0 %391, %v388
      %v393 = vpop.permute.xlu0 %392
      %396 = vset.pattern.permute.xlu0 0
      %397 = vperm.xlu0 %396, %v389
      %v398 = vpop.permute.xlu0 %397
      %v402 = vunpack.c.l.b16 %v386
      %v403 = vunpack.c.l.b16 %v387
      %v404 = vpack.c.b16 %v403, %v402
      %vm405 = vcmask 23552
      %v407 = vsel %vm405, %v404, 0
      %vm409 = vcmask 1040384
      %vm410 = vcmask 1041408
      %v411 = vsel %vm409, 4294967295, 65535
      %v412 = vsel %vm410, %v411, 0
      %v414 = vand.u32 %v385, %v412
      %416 = vmatpush.bf16.msra.mxu0 0
      %417 = vmatpush.bf16.msra.mxu0 0
      %418 = vmatpush.bf16.msra.mxu0 0
      %419 = vmatpush.bf16.msra.mxu0 0
      %420 = vmatpush.bf16.msra.mxu0 0
      %421 = vmatpush.bf16.msra.mxu0 0
      %422 = vmatpush.bf16.msra.mxu0 0
      %423 = vmatpush.bf16.msra.mxu0 %v414
      %424 = vmatmul.bf16.gmra.mxu0 %v407
      %v425 = vpop.f32.mrf.mxu0
      %v426 = vadd.f32 %v393, %v425
      %v427 = vpop.f32.mrf.mxu0
      %v428 = vadd.f32 %v398, %v427
      %429 = vdwg.mxu0
      %v430 = vmax.f32 %v426, 0.0
      %v431 = vmax.f32 %v428, 0.0
      %v432 = vpack.c.bf16 %v431, %v430
      %v433 = vld [vmem:[%s3] sm:$0xf]
      %v434 = vld [vmem:[%s3 + $0x4] sm:$0xf]
      %v435 = vld [vmem:[%s3 + $0x8] sm:$0xf]
      %v436 = vld [vmem:[%s3 + $0xc] sm:$0xf]
      %v437 = vld [vmem:[%s4] sm:$0xff]
      %v438 = vld [vmem:[%s4 + $0x8] sm:$0xff]
      %v439 = vld [vmem:[%s4 + $0x10] sm:$0xff]
      %v440 = vld [vmem:[%s4 + $0x18] sm:$0xff]
      %442 = vset.pattern.permute.xlu0 0
      %443 = vperm.xlu0 %442, %v437
      %v444 = vpop.permute.xlu0 %443
      %447 = vset.pattern.permute.xlu0 0
      %448 = vperm.xlu0 %447, %v438
      %v449 = vpop.permute.xlu0 %448
      %452 = vset.pattern.permute.xlu0 0
      %453 = vperm.xlu0 %452, %v439
      %v454 = vpop.permute.xlu0 %453
      %457 = vset.pattern.permute.xlu0 0
      %458 = vperm.xlu0 %457, %v440
      %v459 = vpop.permute.xlu0 %458
      %v465 = vunpack.c.l.b16 %v433
      %v466 = vunpack.c.l.b16 %v434
      %v467 = vunpack.c.l.b16 %v435
      %v468 = vunpack.c.l.b16 %v436
      %v469 = vpack.c.b16 %v466, %v465
      %v470 = vpack.c.b16 %v468, %v467
      %vm471 = vcmask 130048
      %v473 = vsel %vm471, %v469, 0
      %v476 = vsel %vm471, %v470, 0
      %478 = vmatpush.bf16.msra.mxu0 0
      %479 = vmatpush.bf16.msra.mxu0 0
      %480 = vmatpush.bf16.msra.mxu0 0
      %481 = vmatpush.bf16.msra.mxu0 0
      %482 = vmatpush.bf16.msra.mxu0 0
      %483 = vmatpush.bf16.msra.mxu0 0
      %484 = vmatpush.bf16.msra.mxu0 0
      %485 = vmatpush.bf16.msra.mxu0 %v432
      %486 = vmatmul.bf16.gmra.mxu0 %v473
      %v487 = vpop.f32.mrf.mxu0
      %v488 = vadd.f32 %v444, %v487
      %v489 = vpop.f32.mrf.mxu0
      %v490 = vadd.f32 %v449, %v489
      %491 = vmatmul.bf16.gmra.mxu0 %v476
      %v492 = vpop.f32.mrf.mxu0
      %v493 = vadd.f32 %v454, %v492
      %v494 = vpop.f32.mrf.mxu0
      %v495 = vadd.f32 %v459, %v494
      %496 = vdwg.mxu0
      %v497 = vmax.f32 %v488, 0.0
      %v498 = vmax.f32 %v490, 0.0
      %v499 = vmax.f32 %v493, 0.0
      %v500 = vmax.f32 %v495, 0.0
      %v501 = vpack.c.bf16 %v498, %v497
      %v502 = vpack.c.bf16 %v500, %v499
      %v503 = vunpack.c.l.bf16 %v501
      %v504 = vunpack.c.h.bf16 %v501
      %v505 = vunpack.c.l.bf16 %v502
      %v506 = vunpack.c.h.bf16 %v502
      %507 = vmax.xlane.f32.xlu0 %v503
      %v508 = vpop.xlane.xlu0 %507
      %509 = vmax.xlane.f32.xlu0 %v504
      %v510 = vpop.xlane.xlu0 %509
      %511 = vmax.xlane.f32.xlu0 %v505
      %v512 = vpop.xlane.xlu0 %511
      %513 = vmax.xlane.f32.xlu0 %v506
      %v514 = vpop.xlane.xlu0 %513
      %v515 = vpack.c.bf16 %v510, %v508
      %v516 = vpack.c.bf16 %v514, %v512
      %v517 = vld [vmem:[%s5] sm:$0xf]
      %v518 = vld [vmem:[%s5 + $0x4] sm:$0xf]
      %v519 = vld [vmem:[%s5 + $0x8] sm:$0xf]
      %v520 = vld [vmem:[%s5 + $0xc] sm:$0xf]
      %v521 = vld [vmem:[%s6] sm:$0xff]
      %v522 = vld [vmem:[%s6 + $0x8] sm:$0xff]
      %v523 = vld [vmem:[%s6 + $0x10] sm:$0xff]
      %v524 = vld [vmem:[%s6 + $0x18] sm:$0xff]
      %v529 = vunpack.c.l.b16 %v517
      %v530 = vunpack.c.l.b16 %v518
      %v531 = vunpack.c.l.b16 %v519
      %v532 = vunpack.c.l.b16 %v520
      %v533 = vpack.c.b16 %v530, %v529
      %v534 = vpack.c.b16 %v532, %v531
      %vm535 = vcmask 261120
      %v537 = vsel %vm535, %v533, 0
      %v540 = vsel %vm535, %v534, 0
      %542 = vmatpush.bf16.msra.mxu0 0
      %543 = vmatpush.bf16.msra.mxu0 0
      %544 = vmatpush.bf16.msra.mxu0 0
      %545 = vmatpush.bf16.msra.mxu0 0
      %546 = vmatpush.bf16.msra.mxu0 0
      %547 = vmatpush.bf16.msra.mxu0 0
      %548 = vmatpush.bf16.msra.mxu0 %v516
      %549 = vmatpush.bf16.msra.mxu0 %v515
      %550 = vmatmul.bf16.gmra.mxu0 %v537
      %v551 = vpop.f32.mrf.mxu0
      %v552 = vadd.f32 %v521, %v551
      %v553 = vpop.f32.mrf.mxu0
      %v554 = vadd.f32 %v522, %v553
      %555 = vmatmul.bf16.gmra.mxu0 %v540
      %v556 = vpop.f32.mrf.mxu0
      %v557 = vadd.f32 %v523, %v556
      %v558 = vpop.f32.mrf.mxu0
      %v559 = vadd.f32 %v524, %v558
      %560 = vdwg.mxu0
      %v561 = vmax.f32 %v552, 0.0
      %v562 = vmax.f32 %v554, 0.0
      %v563 = vmax.f32 %v557, 0.0
      %v564 = vmax.f32 %v559, 0.0
      %v565 = vpack.c.bf16 %v562, %v561
      %v566 = vpack.c.bf16 %v564, %v563
      %v567 = vld [vmem:[%s7] sm:$0xf]
      %v568 = vld [vmem:[%s7 + $0x4] sm:$0xf]
      %v569 = vld [vmem:[%s8] sm:$0xff]
      %v570 = vld [vmem:[%s8 + $0x8] sm:$0xff]
      %v573 = vunpack.c.l.b16 %v567
      %v574 = vunpack.c.l.b16 %v568
      %v575 = vpack.c.b16 %v574, %v573
      %v577 = vsel %vm535, %v575, 0
      %579 = vmatpush.bf16.msra.mxu0 0
      %580 = vmatpush.bf16.msra.mxu0 0
      %581 = vmatpush.bf16.msra.mxu0 0
      %582 = vmatpush.bf16.msra.mxu0 0
      %583 = vmatpush.bf16.msra.mxu0 0
      %584 = vmatpush.bf16.msra.mxu0 0
      %585 = vmatpush.bf16.msra.mxu0 %v566
      %586 = vmatpush.bf16.msra.mxu0 %v565
      %587 = vmatmul.bf16.gmra.mxu0 %v577
      %v588 = vpop.f32.mrf.mxu0
      %v589 = vadd.f32 %v569, %v588
      %v590 = vpop.f32.mrf.mxu0
      %v591 = vadd.f32 %v570, %v590
      %592 = vdwg.mxu0
      %v593 = vmax.f32 %v589, 0.0
      %v594 = vmax.f32 %v591, 0.0
      %v595 = vpack.c.bf16 %v594, %v593
      %v596 = vld [vmem:[%s9] sm:$0xf]
      %v597 = vld [vmem:[%s9 + $0x4] sm:$0x1]
      %v598 = vld [vmem:[%s10] sm:$0xff]
      %v599 = vld [vmem:[%s10 + $0x8] sm:$0x1]
      %v602 = vunpack.c.l.b16 %v596
      %v603 = vunpack.c.l.b16 %v597
      %v604 = vpack.c.b16 %v603, %v602
      %v606 = vsel %vm471, %v604, 0
      %608 = vmatpush.bf16.msra.mxu0 0
      %609 = vmatpush.bf16.msra.mxu0 0
      %610 = vmatpush.bf16.msra.mxu0 0
      %611 = vmatpush.bf16.msra.mxu0 0
      %612 = vmatpush.bf16.msra.mxu0 0
      %613 = vmatpush.bf16.msra.mxu0 0
      %614 = vmatpush.bf16.msra.mxu0 0
      %615 = vmatpush.bf16.msra.mxu0 %v595
      %616 = vmatmul.bf16.gmra.mxu0 %v606
      %v617 = vpop.f32.mrf.mxu0
      %v618 = vadd.f32 %v598, %v617
      %v619 = vpop.f32.mrf.mxu0
      %v620 = vadd.f32 %v599, %v619
      %621 = vdwg.mxu0
      %vm622 = vcmask 7168
      %623 = vst.msk [vmem:[%s383] sm:$0xff] %vm622, %v618
      %vm624 = vcmask 0
      %625 = vst.msk [vmem:[%s383 + $0x8] sm:$0x1] %vm624, %v620
      %p626 = scmp.lt.s32.totalorder %s22, 1
      %s627 = scalar_select %p626, %s22, 1
      %s628 = smul.addr %s627, 2
      %s629 = smul.addr %s628, 8
      %s630 = scalar_lea.vmem %s11, %s629
      // Predicated region
      $region65: #{tpu_custom_call.1} parent=63 // pred_check
        %p631 = pneg %p276
      $region66: #{tpu_custom_call.1} parent=63 // pred_check_branch
        %633 = sbr.rel (%p631) target = $region68
      $region67: #{tpu_custom_call.1} parent=63 // pred_region
        _
      $region68: #{tpu_custom_call.1} parent=63 // pred_fallthru
        _
    $region64: #{tpu_custom_call.1} parent=5 // pred_fallthru
      _
    %p634 = scmp.le.s32.totalorder 2, %s17
    // Predicated region
    $region69: #{tpu_custom_call.1} parent=5 // pred_check
      %p635 = pneg %p634
    $region70: #{tpu_custom_call.1} parent=5 // pred_check_branch
      %637 = sbr.rel (%p635) target = $region72
    $region71: #{tpu_custom_call.1} parent=5 // pred_region
      %s638 = ssub.s32 %s17, 2
      // Predicated region
      $region73: #{tpu_custom_call.1} parent=71 // pred_check
        %p639 = pneg %p282
      $region74: #{tpu_custom_call.1} parent=71 // pred_check_branch
        %641 = sbr.rel (%p639) target = $region76
      $region75: #{tpu_custom_call.1} parent=71 // pred_region
        %p642 = scmp.lt.s32.totalorder %s23, 1
        %s643 = scalar_select %p642, %s23, 1
        %s644 = smul.addr %s643, 2
        %s645 = smul.addr %s644, 8
        %s646 = scalar_lea.vmem %s11, %s645
      $region76: #{tpu_custom_call.1} parent=71 // pred_fallthru
        _
    $region72: #{tpu_custom_call.1} parent=5 // pred_fallthru
      _
  $region6: #{tpu_custom_call.1} parent=0 // loop_footer
    %s21 = sadd.s32 1, %s17
  $region7: #{tpu_custom_call.1} parent=0 // loop_footer_branch
    %16 = sbr.rel target = $region3
  $region8: #{tpu_custom_call.1} parent=0 // loop_exit
    _

</llo_original>
